<compile_context>
chip_gen: v6e
topology: v6e:2x2x1
jax: 0.10.0
libtpu: 0.0.40
codegen_flags: <defaults>
</compile_context>

<pallas_src>
import jax
import jax.numpy as jnp
from jax.experimental import pallas as pl
from jax.experimental.pallas import tpu as pltpu

LANE = 128


def _round_up(v, m):
    return ((v + m - 1) // m) * m


def _sublane_pack(dtype):
    # Sublane packing: 8 rows for 32-bit, 16 for 16-bit, 32 for 8-bit dtypes.
    return {4: 8, 2: 16, 1: 32}.get(jnp.dtype(dtype).itemsize, 8)


def _largest_divisor(total, cap, step):
    """Largest multiple of `step` that divides `total` and is <= cap."""
    d = min(cap, total)
    d -= d % step
    while d > step and total % d != 0:
        d -= step
    return max(d, step)


def _vmem_budget_bytes():
    """~75% of physical VMEM (generation-aware: v7x 64 MiB, v5e/v6e 128 MiB)."""
    try:
        return int(0.75 * pltpu.get_tpu_info().vmem_capacity_bytes)
    except Exception:
        return 48 * 1024 * 1024  # conservative fallback that is safe on v7x


# ----------------------------------------------------------------------------- kernels
def _linear_kernel_1k(x_ref, w_ref, b_ref, o_ref):
    """Single-K-step fast path: no scratch accumulator, no branches."""
    acc = jnp.dot(x_ref[...], w_ref[...], preferred_element_type=jnp.float32)
    o_ref[...] = (acc + b_ref[...].astype(jnp.float32)).astype(o_ref.dtype)


def _linear_kernel_multi_k(x_ref, w_ref, b_ref, o_ref, acc_ref):
    """General path: f32 VMEM accumulator over the K grid axis."""
    k = pl.program_id(2)

    @pl.when(k == 0)
    def _init():
        acc_ref[...] = jnp.zeros_like(acc_ref)

    acc_ref[...] += jnp.dot(
        x_ref[...], w_ref[...], preferred_element_type=jnp.float32
    )

    @pl.when(k == pl.num_programs(2) - 1)
    def _epilogue():
        out = acc_ref[...] + b_ref[...].astype(jnp.float32)
        o_ref[...] = out.astype(o_ref.dtype)


# ----------------------------------------------------------------------------- wrapper
def prepare_head_params(w, b, compute_dtype=None):
    """Pad W.T / b to lane multiples ONCE at init (hoisted out of the hot path).

    w: [num_classes, in_dims] (PyTorch nn.Linear layout), b: [num_classes].
    Returns (w_t_pad [Kp, Np], b_pad [1, Np], num_classes).
    """
    num_classes, in_dims = w.shape
    Kp = _round_up(in_dims, LANE)
    Np = _round_up(num_classes, LANE)
    w_t = jnp.asarray(w).T
    if compute_dtype is not None:
        w_t = w_t.astype(compute_dtype)
    w_t_pad = jnp.pad(w_t, ((0, Kp - in_dims), (0, Np - num_classes)))
    b_pad = jnp.pad(jnp.asarray(b), (0, Np - num_classes)).reshape(1, Np)
    return w_t_pad, b_pad, num_classes


def head_forward(x, w_t_pad, b_pad, num_classes, *, trim_n=True, compute_dtype=None):
    """y = x @ W.T + b with pre-padded (lane-aligned) weight / bias.

    x: [B, in_dims]; w_t_pad: [Kp, Np] (multiples of 128); b_pad: [1, Np].
    """
    B, K = x.shape
    Kp, Np = w_t_pad.shape
    assert Kp == _round_up(K, LANE), "w_t_pad K dim must be round_up(in_dims,128)"
    assert Np >= num_classes

    out_dtype = x.dtype
    if compute_dtype is not None:
        x = x.astype(compute_dtype)

    pack = _sublane_pack(x.dtype)
    Mp = _round_up(B, pack)

    # Tile sizes: MXU/lane-aligned divisors of the padded dims. Big tiles reduce
    # grid-step overhead and weight re-streaming; working set stays well inside
    # even v7x's VMEM budget (tm*tk + tk*tn + tm*tn << 48 MiB at 512/1024/512).
    tm = _largest_divisor(Mp, 512, pack)
    tn = _largest_divisor(Np, 1024, LANE)
    tk = _largest_divisor(Kp, 512, LANE)

    # Only x is padded per call (rows to sublane pack, K up to the lane multiple).
    if Mp != B or Kp != K:
        x = jnp.pad(x, ((0, Mp - B), (0, Kp - K)))

    n_k = Kp // tk
    in_bytes = jnp.dtype(x.dtype).itemsize
    out_bytes = jnp.dtype(out_dtype).itemsize
    working_set = (
        2 * (tm * tk + tk * tn + tn) * in_bytes
        + 2 * tm * tn * out_bytes
        + (tm * tn * 4 if n_k > 1 else 0)
    )
    vmem_limit = int(min(max(2 * working_set, 16 << 20), _vmem_budget_bytes()))

    cost = pl.CostEstimate(
        flops=2 * Mp * Kp * Np,
        transcendentals=0,
        bytes_accessed=(Mp * Kp + Kp * Np + Np) * in_bytes + Mp * Np * out_bytes,
    )

    if n_k == 1:
        # Fast path (covers the shipped in_dims=128): 2-D grid, no scratch.
        out_padded = pl.pallas_call(
            _linear_kernel_1k,
            out_shape=jax.ShapeDtypeStruct((Mp, Np), out_dtype),
            grid_spec=pltpu.PrefetchScalarGridSpec(
                num_scalar_prefetch=0,
                grid=(Mp // tm, Np // tn),
                in_specs=[
                    pl.BlockSpec((tm, tk), lambda i, j: (i, 0)),   # x tile
                    pl.BlockSpec((tk, tn), lambda i, j: (0, j)),   # w_t tile
                    pl.BlockSpec((1, tn), lambda i, j: (0, j)),    # bias tile
                ],
                out_specs=pl.BlockSpec((tm, tn), lambda i, j: (i, j)),
            ),
            compiler_params=pltpu.CompilerParams(
                dimension_semantics=("parallel", "parallel"),
                vmem_limit_bytes=vmem_limit,
            ),
            cost_estimate=cost,
        )(x, w_t_pad, b_pad)
    else:
        out_padded = pl.pallas_call(
            _linear_kernel_multi_k,
            out_shape=jax.ShapeDtypeStruct((Mp, Np), out_dtype),
            grid_spec=pltpu.PrefetchScalarGridSpec(
                num_scalar_prefetch=0,
                grid=(Mp // tm, Np // tn, n_k),
                in_specs=[
                    pl.BlockSpec((tm, tk), lambda i, j, k: (i, k)),
                    pl.BlockSpec((tk, tn), lambda i, j, k: (k, j)),
                    pl.BlockSpec((1, tn), lambda i, j, k: (0, j)),
                ],
                out_specs=pl.BlockSpec((tm, tn), lambda i, j, k: (i, j)),
                scratch_shapes=[pltpu.VMEM((tm, tn), jnp.float32)],
            ),
            compiler_params=pltpu.CompilerParams(
                dimension_semantics=("parallel", "parallel", "arbitrary"),
                vmem_limit_bytes=vmem_limit,
            ),
            cost_estimate=cost,
        )(x, w_t_pad, b_pad)

    # Slice only what was actually padded; consumers that can take the lane-dense
    # padded slab should pass trim_n=False to skip the N slice copy.
    if Mp != B:
        out_padded = out_padded[:B]
    if trim_n and Np != num_classes:
        out_padded = out_padded[:, :num_classes]
    return out_padded


if __name__ == "__main__":
    # Head(num_classes=16, in_dims=128); small deterministic example.
    key = jax.random.PRNGKey(0)
    k_x, k_w, k_b = jax.random.split(key, 3)

    B = 8
    in_dims = 128
    num_classes = 16

    # Deterministic parameter init mimicking nn.Linear (uniform +-1/sqrt(in_dims)).
    bound = 1.0 / jnp.sqrt(jnp.float32(in_dims))
    w = jax.random.uniform(k_w, (num_classes, in_dims), jnp.float32, -bound, bound)
    b = jax.random.uniform(k_b, (num_classes,), jnp.float32, -bound, bound)
    x = jax.random.normal(k_x, (B, in_dims), jnp.float32)

    # Pad weight/bias ONCE (init-time), then run the per-call kernel wrapper.
    w_t_pad, b_pad, n_cls = prepare_head_params(w, b)
    y = head_forward(x, w_t_pad, b_pad, n_cls)
    y = jax.block_until_ready(y)

    # Reference check against plain JAX (same math as PyTorch's F.linear).
    y_ref = x @ w.T + b
    assert y.shape == (B, num_classes)
    assert jnp.allclose(y, y_ref, atol=1e-5, rtol=1e-5)

    print("KERNEL_OK")
</pallas_src>

<mosaic_0001>
module attributes {stable_mosaic.version = 11 : i64} {
  func.func @_linear_kernel_1k(%arg0: i32, %arg1: i32, %arg2: memref<8x128xf32, #tpu.memory_space<vmem>>, %arg3: memref<128x128xf32, #tpu.memory_space<vmem>>, %arg4: memref<1x128xf32, #tpu.memory_space<vmem>>, %arg5: memref<8x128xf32, #tpu.memory_space<vmem>>) attributes {dimension_semantics = [#tpu.dimension_semantics<parallel>, #tpu.dimension_semantics<parallel>], iteration_bounds = array<i64: 1, 1>, scalar_prefetch = 0 : i64, scratch_operands = 0 : i64, tpu.core_type = #tpu.core_type<tc>, window_params = [{transform_indices = @transform_0, window_bounds = array<i64: 8, 128>}, {transform_indices = @transform_1, window_bounds = array<i64: 128, 128>}, {transform_indices = @transform_2, window_bounds = array<i64: 1, 128>}, {transform_indices = @transform_3, window_bounds = array<i64: 8, 128>}]} {
    %c0 = arith.constant 0 : index
    %c0_0 = arith.constant 0 : index
    %0 = vector.load %arg2[%c0, %c0_0] : memref<8x128xf32, #tpu.memory_space<vmem>>, vector<8x128xf32>
    %c0_1 = arith.constant 0 : index
    %c0_2 = arith.constant 0 : index
    %1 = vector.load %arg3[%c0_1, %c0_2] : memref<128x128xf32, #tpu.memory_space<vmem>>, vector<128x128xf32>
    %cst = arith.constant dense<0.000000e+00> : vector<8x128xf32>
    %2 = tpu.matmul %0, %1, %cst {dimension_numbers = #tpu.dot_dimension_numbers<[1], [0], [0], [1], [0, 0, 1, 1], [], []>} : vector<8x128xf32>, vector<128x128xf32>, vector<8x128xf32> -> vector<8x128xf32>
    %c0_3 = arith.constant 0 : index
    %c0_4 = arith.constant 0 : index
    %3 = vector.load %arg4[%c0_3, %c0_4] : memref<1x128xf32, #tpu.memory_space<vmem>>, vector<1x128xf32>
    %4 = vector.broadcast %3 : vector<1x128xf32> to vector<8x128xf32>
    %5 = arith.addf %2, %4 : vector<8x128xf32>
    %c0_5 = arith.constant 0 : index
    %c0_6 = arith.constant 0 : index
    %6 = vector.load %arg5[%c0_5, %c0_6] : memref<8x128xf32, #tpu.memory_space<vmem>>, vector<8x128xf32>
    tpu.vector_store %arg5[%c0_5, %c0_6], %5 {strides = array<i32>} : memref<8x128xf32, #tpu.memory_space<vmem>>, vector<8x128xf32>,
    return
  }
  func.func @transform_0(%arg0: i32, %arg1: i32) -> (i32, i32) {
    %c0_i32 = arith.constant 0 : i32
    %c0_i32_0 = arith.constant 0 : i32
    return %arg0, %c0_i32 : i32, i32
  }
  func.func @transform_1(%arg0: i32, %arg1: i32) -> (i32, i32) {
    %c0_i32 = arith.constant 0 : i32
    %c0_i32_0 = arith.constant 0 : i32
    return %c0_i32, %arg1 : i32, i32
  }
  func.func @transform_2(%arg0: i32, %arg1: i32) -> (i32, i32) {
    %c0_i32 = arith.constant 0 : i32
    %c0_i32_0 = arith.constant 0 : i32
    return %c0_i32, %arg1 : i32, i32
  }
  func.func @transform_3(%arg0: i32, %arg1: i32) -> (i32, i32) {
    %c0_i32 = arith.constant 0 : i32
    return %arg0, %arg1 : i32, i32
  }
}

</mosaic_0001>

<llo_original>
// kernel: tpu_custom_call.1
$region0: #{tpu_custom_call.1}
  #allocation0 [shape = 'u32[]', space=smem, size = 0x4, offset = 0x4, fixed_abs, tag = 'smem constant byte address 0x4 - core index']
  #allocation1 [shape = 'u32[144,128]{1,0:T(1,128)}', space=vmem, size = 0x12000, scoped, tag = 'internal scratch']
  %s0 = inlined_call_operand.hbm [shape: f32[8,128], index: 0, kind: input, shape index: {}]
  %s1 = inlined_call_operand.hbm [shape: f32[128,128], index: 1, kind: input, shape index: {}]
  %s2 = inlined_call_operand.vmem [shape: f32[1,128], index: 2, kind: input, shape index: {}]
  %s3 = inlined_call_operand.hbm [shape: f32[8,128], index: 3, kind: output, shape index: {}]
  %s4 = sld [smem:[#allocation0]]
  $region30: #{tpu_custom_call.1} parent=0
    _
  %s6 = ssub.s32 1, %s4
  %s7 = scalar_select 0, %s6, %s4
  $region1: #{tpu_custom_call.1} parent=0
    #allocation2 [shape = 'u8[4096]{0}', space=vmem, size = 0x1000, scoped, tag = 'input window, operand 0, single buffered']
    #allocation3 [shape = 's32[1]{0}', space=sflag, size = 0x4, scoped, tag = 'scoped memory for tpu_custom_call.1']
    #allocation4 [shape = 's32[1]{0}', space=sflag, size = 0x4, scoped, tag = 'scoped memory for tpu_custom_call.1']
    #allocation5 [shape = 'u8[65536]{0}', space=vmem, size = 0x10000, scoped, tag = 'input window, operand 1, single buffered']
    #allocation6 [shape = 's32[1]{0}', space=sflag, size = 0x4, scoped, tag = 'scoped memory for tpu_custom_call.1']
    #allocation7 [shape = 'u8[4096]{0}', space=vmem, size = 0x1000, scoped, tag = 'output window, operand 0, single buffered']
    %8 = vsyncpa [#allocation3], 0
    %9 = vsyncpa [#allocation6], 0
    %10 = vsyncpa [#allocation4], 0
    // Predicated region
    $region2: #{tpu_custom_call.1} parent=1 // pred_check
      _
    $region3: #{tpu_custom_call.1} parent=1 // pred_check_branch
      %12 = sbr.rel (0) target = $region5
    $region4: #{tpu_custom_call.1} parent=1 // pred_region
      %s14 = ssub.s32 128, 128
      %15 = vsyncadd [#allocation3], %s14
      %s17 = sshll.u32 [#allocation2], 4
      %s18 = int_to_ptr.vmem [resolvable:$true] %s17
      %20 = dma.hbm_to_vmem [thread:$0]  %s0, 128, %s18, [#allocation3]
    $region5: #{tpu_custom_call.1} parent=1 // pred_fallthru
      _
    // Predicated region
    $region6: #{tpu_custom_call.1} parent=1 // pred_check
      _
    $region7: #{tpu_custom_call.1} parent=1 // pred_check_branch
      %22 = sbr.rel (0) target = $region9
    $region8: #{tpu_custom_call.1} parent=1 // pred_region
      %s24 = ssub.s32 2048, 2048
      %25 = vsyncadd [#allocation6], %s24
      %s26 = sshll.u32 [#allocation5], 4
      %s27 = int_to_ptr.vmem [resolvable:$true] %s26
      %32 = dma.hbm_to_vmem [thread:$0]  %s1, 2048, %s27, [#allocation6], 128, 128, 8
    $region9: #{tpu_custom_call.1} parent=1 // pred_fallthru
      _
    // Predicated region
    $region10: #{tpu_custom_call.1} parent=1 // pred_check
      _
    $region11: #{tpu_custom_call.1} parent=1 // pred_check_branch
      %34 = sbr.rel (0) target = $region13
    $region12: #{tpu_custom_call.1} parent=1 // pred_region
      _
    $region13: #{tpu_custom_call.1} parent=1 // pred_fallthru
      _
    // Predicated region
    $region14: #{tpu_custom_call.1} parent=1 // pred_check
      _
    $region15: #{tpu_custom_call.1} parent=1 // pred_check_branch
      %36 = sbr.rel (0) target = $region17
    $region16: #{tpu_custom_call.1} parent=1 // pred_region
      %37 = dma.done [#allocation3], 128
    $region17: #{tpu_custom_call.1} parent=1 // pred_fallthru
      _
    // Predicated region
    $region18: #{tpu_custom_call.1} parent=1 // pred_check
      _
    $region19: #{tpu_custom_call.1} parent=1 // pred_check_branch
      %39 = sbr.rel (0) target = $region21
    $region20: #{tpu_custom_call.1} parent=1 // pred_region
      %40 = dma.done [#allocation6], 2048
    $region21: #{tpu_custom_call.1} parent=1 // pred_fallthru
      _
    %v41 = vld [vmem:[#allocation2] sm:$0xff]
    %v42 = vld [vmem:[#allocation5] sm:$0xff]
    %v43 = vld [vmem:[#allocation5 + $0x8] sm:$0xff]
    %v44 = vld [vmem:[#allocation5 + $0x10] sm:$0xff]
    %v45 = vld [vmem:[#allocation5 + $0x18] sm:$0xff]
    %v46 = vld [vmem:[#allocation5 + $0x20] sm:$0xff]
    %v47 = vld [vmem:[#allocation5 + $0x28] sm:$0xff]
    %v48 = vld [vmem:[#allocation5 + $0x30] sm:$0xff]
    %v49 = vld [vmem:[#allocation5 + $0x38] sm:$0xff]
    %v50 = vld [vmem:[#allocation5 + $0x40] sm:$0xff]
    %v51 = vld [vmem:[#allocation5 + $0x48] sm:$0xff]
    %v52 = vld [vmem:[#allocation5 + $0x50] sm:$0xff]
    %v53 = vld [vmem:[#allocation5 + $0x58] sm:$0xff]
    %v54 = vld [vmem:[#allocation5 + $0x60] sm:$0xff]
    %v55 = vld [vmem:[#allocation5 + $0x68] sm:$0xff]
    %v56 = vld [vmem:[#allocation5 + $0x70] sm:$0xff]
    %v57 = vld [vmem:[#allocation5 + $0x78] sm:$0xff]
    %v58 = vld [vmem:[%s2] sm:$0x1]
    %v60 = vlaneseq
    %v61 = vshrl.u32 %v60, 7
    %v62 = vsub.s32 0, %v61
    %v63 = vrot.slane %v58, %v62
    %65 = vmatprep.subr.mxu0 0.0
    %66 = vmatpush1.msra.mxu0 %v57
    %67 = vmatprep.subr.mxu0 0.0
    %68 = vmatpush1.msra.mxu0 %v56
    %69 = vmatprep.subr.mxu0 0.0
    %70 = vmatpush1.msra.mxu0 %v55
    %71 = vmatprep.subr.mxu0 0.0
    %72 = vmatpush1.msra.mxu0 %v54
    %73 = vmatprep.subr.mxu0 0.0
    %74 = vmatpush1.msra.mxu0 %v53
    %75 = vmatprep.subr.mxu0 0.0
    %76 = vmatpush1.msra.mxu0 %v52
    %77 = vmatprep.subr.mxu0 0.0
    %78 = vmatpush1.msra.mxu0 %v51
    %79 = vmatprep.subr.mxu0 0.0
    %80 = vmatpush1.msra.mxu0 %v50
    %81 = vmatprep.subr.mxu0 0.0
    %82 = vmatpush1.msra.mxu0 %v49
    %83 = vmatprep.subr.mxu0 0.0
    %84 = vmatpush1.msra.mxu0 %v48
    %85 = vmatprep.subr.mxu0 0.0
    %86 = vmatpush1.msra.mxu0 %v47
    %87 = vmatprep.subr.mxu0 0.0
    %88 = vmatpush1.msra.mxu0 %v46
    %89 = vmatprep.subr.mxu0 0.0
    %90 = vmatpush1.msra.mxu0 %v45
    %91 = vmatprep.subr.mxu0 0.0
    %92 = vmatpush1.msra.mxu0 %v44
    %93 = vmatprep.subr.mxu0 0.0
    %94 = vmatpush1.msra.mxu0 %v43
    %95 = vmatprep.subr.mxu0 0.0
    %96 = vmatpush1.msra.mxu0 %v42
    %97 = vmatprep.subr.mxu0 0.0
    %98 = vmatpush2.msra.mxu0 0.0
    %99 = vmatprep.subr.mxu0 0.0
    %100 = vmatpush2.msra.mxu0 0.0
    %101 = vmatprep.subr.mxu0 0.0
    %102 = vmatpush2.msra.mxu0 0.0
    %103 = vmatprep.subr.mxu0 0.0
    %104 = vmatpush2.msra.mxu0 0.0
    %105 = vmatprep.subr.mxu0 0.0
    %106 = vmatpush2.msra.mxu0 0.0
    %107 = vmatprep.subr.mxu0 0.0
    %108 = vmatpush2.msra.mxu0 0.0
    %109 = vmatprep.subr.mxu0 0.0
    %110 = vmatpush2.msra.mxu0 0.0
    %111 = vmatprep.subr.mxu0 0.0
    %112 = vmatpush2.msra.mxu0 0.0
    %113 = vmatprep.subr.mxu0 0.0
    %114 = vmatpush2.msra.mxu0 0.0
    %115 = vmatprep.subr.mxu0 0.0
    %116 = vmatpush2.msra.mxu0 0.0
    %117 = vmatprep.subr.mxu0 0.0
    %118 = vmatpush2.msra.mxu0 0.0
    %119 = vmatprep.subr.mxu0 0.0
    %120 = vmatpush2.msra.mxu0 0.0
    %121 = vmatprep.subr.mxu0 0.0
    %122 = vmatpush2.msra.mxu0 0.0
    %123 = vmatprep.subr.mxu0 0.0
    %124 = vmatpush2.msra.mxu0 0.0
    %125 = vmatprep.subr.mxu0 0.0
    %126 = vmatpush2.msra.mxu0 0.0
    %127 = vmatprep.subr.mxu0 0.0
    %128 = vmatpush2.msra.mxu0 0.0
    %129 = vmatprep.mubr.f32.mxu0 0.0
    %130 = vmatmul.mubr.f32.gmra.mxu0 %v41
    %v131 = vpop.f32.mrf.mxu0
    %v132 = vadd.f32 %v63, %v131
    %v133 = vpop.f32.mrf.mxu0
    %134 = vdwg.mxu0
    %135 = vst [vmem:[#allocation7] sm:$0xff] %v132
    // Predicated region
    $region22: #{tpu_custom_call.1} parent=1 // pred_check
      _
    $region23: #{tpu_custom_call.1} parent=1 // pred_check_branch
      %137 = sbr.rel (0) target = $region25
    $region24: #{tpu_custom_call.1} parent=1 // pred_region
      %s139 = ssub.s32 128, 128
      %140 = vsyncadd [#allocation4], %s139
      %s142 = sshll.u32 [#allocation7], 4
      %s143 = int_to_ptr.vmem [resolvable:$true] %s142
      %145 = dma.vmem_to_hbm [thread:$0]  %s143, 128, %s3, [#allocation4]
    $region25: #{tpu_custom_call.1} parent=1 // pred_fallthru
      _
    // Predicated region
    $region26: #{tpu_custom_call.1} parent=1 // pred_check
      _
    $region27: #{tpu_custom_call.1} parent=1 // pred_check_branch
      %147 = sbr.rel (0) target = $region29
    $region28: #{tpu_custom_call.1} parent=1 // pred_region
      %148 = dma.done [#allocation4], 128
    $region29: #{tpu_custom_call.1} parent=1 // pred_fallthru
      _
    %149 = vsyncpa [#allocation3], 1
    %150 = vsyncpa [#allocation6], 1
    %151 = vsyncpa [#allocation4], 1

</llo_original>
